<compile_context>
chip_gen: v5e
topology: v5e:2x2
jax: 0.10.0
libtpu: 0.0.40
codegen_flags: <defaults>
</compile_context>

<pallas_src>
import functools

import jax
import jax.numpy as jnp
from jax import lax
from jax.experimental import pallas as pl
from jax.experimental.pallas import tpu as pltpu


# ------------------------------- fused kernel -------------------------------

def _impaint_fused_kernel(lap_ref, x_ref, w1_ref, w2_ref, w3_ref, w4_ref,
                          b_ref, o_ref, *, f1, f2, f3):
    """Full Impaint forward for one batch element.

    lap_ref: (V, V)        dense rescaled Laplacian (shared across grid)
    x_ref  : (1, V, 1)     input features for this batch element
    w{1,2,3}_ref: (3*Fin, Fout)  merged Chebyshev weights per layer
    w4_ref : (1, 16)       fc weight row (K=1, Fout=1)
    b_ref  : (1, 128)      all biases packed [b1 | b2 | b3 | b4 | pad]
    o_ref  : (1, 1, V)     lane-dense output row
    """
    L = lap_ref[...]                               # (V, V) f32
    x0 = x_ref[0].astype(jnp.float32)              # (V, 1)

    biases = b_ref[...]                            # (1, 128)
    o1, o2, o3 = f1, f1 + f2, f1 + f2 + f3

    def cheb3(xin, w_ref, bias):
        # Chebyshev basis: T0 = x, T1 = Lx, T2 = 2L(Lx) - x  (MXU matmuls).
        x1 = jnp.dot(L, xin, preferred_element_type=jnp.float32)
        x2 = 2.0 * jnp.dot(L, x1, preferred_element_type=jnp.float32) - xin
        # Merge the 3 mixing matmuls into one (V, 3*Fin) @ (3*Fin, Fout).
        xcat = jnp.concatenate([xin, x1, x2], axis=-1)
        out = jnp.dot(xcat, w_ref[...], preferred_element_type=jnp.float32)
        return jnp.maximum(out + bias, 0.0)        # bias-add + ReLU on VPU

    h1 = cheb3(x0, w1_ref, biases[:, 0:o1])        # (V, 16)
    h2 = cheb3(h1, w2_ref, biases[:, o1:o2])       # (V, 64)
    h3 = cheb3(h2, w3_ref, biases[:, o2:o3])       # (V, 16)

    # fc (K=1, Fout=1) fused as an epilogue: (1,16) x (V,16)^T -> (1, V).
    out_row = lax.dot_general(
        w4_ref[...], h3,
        dimension_numbers=(((1,), (1,)), ((), ())),
        preferred_element_type=jnp.float32,
    )                                              # (1, V) lane-dense
    out_row = out_row + biases[:, o3:o3 + 1]
    o_ref[0] = out_row.astype(o_ref.dtype)


def impaint_forward(laplacian, x, params):
    """Full Impaint forward. laplacian: [V,V], x: [B,V,1] -> [B,V,1]."""
    B, V, fin0 = x.shape
    (w1, b1), (w2, b2), (w3, b3), (w4, b4) = params
    f1, f2, f3 = w1.shape[2], w2.shape[2], w3.shape[2]
    assert w4.shape[0] == 1 and w4.shape[2] == 1   # fc: K=1, Fout=1

    # Merge Chebyshev order into the contraction dim: (K, Fin, Fout) -> (K*Fin, Fout).
    w1r = w1.reshape(-1, f1)                       # (3, 16)
    w2r = w2.reshape(-1, f2)                       # (48, 64)
    w3r = w3.reshape(-1, f3)                       # (192, 16)
    w4r = w4.reshape(w4.shape[1], 1).T             # (1, 16)

    # Pack all biases into a single lane-padded (1, 128) slab -> one tiny DMA.
    bias_flat = jnp.concatenate(
        [b1.reshape(-1), b2.reshape(-1), b3.reshape(-1), b4.reshape(-1)])
    nb = bias_flat.shape[0]
    assert nb <= 128
    bias_packed = jnp.zeros((1, 128), jnp.float32).at[0, :nb].set(bias_flat)

    kernel = functools.partial(_impaint_fused_kernel, f1=f1, f2=f2, f3=f3)
    out = pl.pallas_call(
        kernel,
        out_shape=jax.ShapeDtypeStruct((B, 1, V), jnp.float32),
        grid_spec=pltpu.PrefetchScalarGridSpec(
            num_scalar_prefetch=0,
            grid=(B,),
            in_specs=[
                pl.BlockSpec((V, V), lambda bi: (0, 0)),            # Laplacian (shared)
                pl.BlockSpec((1, V, fin0), lambda bi: (bi, 0, 0)),  # per-batch input
                pl.BlockSpec(w1r.shape, lambda bi: (0, 0)),
                pl.BlockSpec(w2r.shape, lambda bi: (0, 0)),
                pl.BlockSpec(w3r.shape, lambda bi: (0, 0)),
                pl.BlockSpec(w4r.shape, lambda bi: (0, 0)),
                pl.BlockSpec((1, 128), lambda bi: (0, 0)),          # packed biases
            ],
            out_specs=pl.BlockSpec((1, 1, V), lambda bi: (bi, 0, 0)),
        ),
        compiler_params=pltpu.CompilerParams(
            dimension_semantics=("parallel",),      # batch -> both TCs on v7x
        ),
    )(laplacian, x, w1r, w2r, w3r, w4r, bias_packed)

    # (B, 1, V) -> (B, V, 1): same flat layout, free reshape in the wrapper.
    return out.reshape(B, V, 1)


# ----------------------------- parameter setup ------------------------------

def init_impaint_params(key):
    """Deterministic init of the Impaint ChebConv weights (shapes from __init__)."""
    layer_defs = [
        # (K, Fin, Fout)
        (3, 1, 16),
        (3, 16, 64),
        (3, 64, 16),
        (1, 16, 1),
    ]
    params = []
    for (K, fin, fout) in layer_defs:
        key, kw, kb = jax.random.split(key, 3)
        std = (2.0 / (K * fin)) ** 0.5
        w = std * jax.random.normal(kw, (K, fin, fout), dtype=jnp.float32)
        bias = 0.01 * jax.random.normal(kb, (1, fout), dtype=jnp.float32)
        params.append((w, bias))
    return params


# --------------------------- pure-JAX reference -----------------------------

def _cheb_ref(L, x, w, b, relu):
    K = w.shape[0]
    xs = [x]
    if K > 1:
        xs.append(jnp.einsum("uv,bvf->buf", L, x))
        for _ in range(2, K):
            xs.append(2.0 * jnp.einsum("uv,bvf->buf", L, xs[-1]) - xs[-2])
    out = sum(jnp.einsum("bvf,fo->bvo", xs[k], w[k]) for k in range(K)) + b
    return jnp.maximum(out, 0.0) if relu else out


def impaint_ref(laplacian, x, params):
    out = x
    n = len(params)
    for i, (w, b) in enumerate(params):
        out = _cheb_ref(laplacian, out, w, b, relu=(i < n - 1))
    return out


# --------------------------------- driver -----------------------------------

if __name__ == "__main__":
    key = jax.random.PRNGKey(0)
    k_lap, k_x, k_params = jax.random.split(key, 3)

    B, V = 2, 64  # small graph: 2 samples, 64 vertices, 1 input channel

    # Deterministic symmetric "rescaled Laplacian"-like matrix, spectrum ~[-1, 1].
    A = jax.random.normal(k_lap, (V, V), dtype=jnp.float32)
    lap = 0.5 * (A + A.T) / jnp.sqrt(jnp.float32(V))

    x = jax.random.normal(k_x, (B, V, 1), dtype=jnp.float32)

    params = init_impaint_params(k_params)

    out = impaint_forward(lap, x, params)
    out = jax.block_until_ready(out)

    ref = impaint_ref(lap, x, params)
    assert out.shape == (B, V, 1), out.shape
    assert jnp.allclose(out, ref, atol=1e-4, rtol=1e-4), (
        float(jnp.max(jnp.abs(out - ref)))
    )

    print("KERNEL_OK")
</pallas_src>

<mosaic_0001>
module attributes {stable_mosaic.version = 11 : i64} {
  func.func @_impaint_fused_kernel(%arg0: i32, %arg1: memref<64x64xf32, #tpu.memory_space<vmem>>, %arg2: memref<1x64x1xf32, #tpu.memory_space<vmem>>, %arg3: memref<3x16xf32, #tpu.memory_space<vmem>>, %arg4: memref<48x64xf32, #tpu.memory_space<vmem>>, %arg5: memref<192x16xf32, #tpu.memory_space<vmem>>, %arg6: memref<1x16xf32, #tpu.memory_space<vmem>>, %arg7: memref<1x128xf32, #tpu.memory_space<vmem>>, %arg8: memref<1x1x64xf32, #tpu.memory_space<vmem>>) attributes {dimension_semantics = [#tpu.dimension_semantics<parallel>], iteration_bounds = array<i64: 2>, scalar_prefetch = 0 : i64, scratch_operands = 0 : i64, tpu.core_type = #tpu.core_type<tc>, window_params = [{pipeline_mode = #tpu.pipeline_mode<synchronous>, transform_indices = @transform_0, window_bounds = array<i64: 64, 64>}, {transform_indices = @transform_1, window_bounds = array<i64: 1, 64, 1>}, {pipeline_mode = #tpu.pipeline_mode<synchronous>, transform_indices = @transform_2, window_bounds = array<i64: 3, 16>}, {pipeline_mode = #tpu.pipeline_mode<synchronous>, transform_indices = @transform_3, window_bounds = array<i64: 48, 64>}, {pipeline_mode = #tpu.pipeline_mode<synchronous>, transform_indices = @transform_4, window_bounds = array<i64: 192, 16>}, {pipeline_mode = #tpu.pipeline_mode<synchronous>, transform_indices = @transform_5, window_bounds = array<i64: 1, 16>}, {pipeline_mode = #tpu.pipeline_mode<synchronous>, transform_indices = @transform_6, window_bounds = array<i64: 1, 128>}, {transform_indices = @transform_7, window_bounds = array<i64: 1, 1, 64>}]} {
    %c0 = arith.constant 0 : index
    %c0_0 = arith.constant 0 : index
    %0 = vector.load %arg1[%c0, %c0_0] : memref<64x64xf32, #tpu.memory_space<vmem>>, vector<64x64xf32>
    %c0_1 = arith.constant 0 : index
    %c0_2 = arith.constant 0 : index
    %c0_3 = arith.constant 0 : index
    %1 = vector.load %arg2[%c0_1, %c0_2, %c0_3] : memref<1x64x1xf32, #tpu.memory_space<vmem>>, vector<1x64x1xf32>
    %2 = vector.shape_cast %1 : vector<1x64x1xf32> to vector<64x1xf32>
    %c0_4 = arith.constant 0 : index
    %c0_5 = arith.constant 0 : index
    %3 = vector.load %arg7[%c0_4, %c0_5] : memref<1x128xf32, #tpu.memory_space<vmem>>, vector<1x128xf32>
    %4 = vector.extract_strided_slice %3 {offsets = [0, 0], sizes = [1, 16], strides = [1, 1]} : vector<1x128xf32> to vector<1x16xf32>
    %cst = arith.constant dense<0.000000e+00> : vector<64x1xf32>
    %5 = tpu.matmul %0, %2, %cst {dimension_numbers = #tpu.dot_dimension_numbers<[1], [0], [0], [1], [0, 0, 1, 1], [], []>} : vector<64x64xf32>, vector<64x1xf32>, vector<64x1xf32> -> vector<64x1xf32>
    %cst_6 = arith.constant dense<0.000000e+00> : vector<64x1xf32>
    %6 = tpu.matmul %0, %5, %cst_6 {dimension_numbers = #tpu.dot_dimension_numbers<[1], [0], [0], [1], [0, 0, 1, 1], [], []>} : vector<64x64xf32>, vector<64x1xf32>, vector<64x1xf32> -> vector<64x1xf32>
    %cst_7 = arith.constant 2.000000e+00 : f32
    %7 = vector.broadcast %cst_7 : f32 to vector<64x1xf32>
    %8 = arith.mulf %7, %6 : vector<64x1xf32>
    %9 = arith.subf %8, %2 : vector<64x1xf32>
    %10 = tpu.concatenate %2, %5, %9 in 1 : vector<64x1xf32>, vector<64x1xf32>, vector<64x1xf32> -> vector<64x3xf32>
    %c0_8 = arith.constant 0 : index
    %c0_9 = arith.constant 0 : index
    %11 = vector.load %arg3[%c0_8, %c0_9] : memref<3x16xf32, #tpu.memory_space<vmem>>, vector<3x16xf32>
    %cst_10 = arith.constant dense<0.000000e+00> : vector<64x16xf32>
    %12 = tpu.matmul %10, %11, %cst_10 {dimension_numbers = #tpu.dot_dimension_numbers<[1], [0], [0], [1], [0, 0, 1, 1], [], []>} : vector<64x3xf32>, vector<3x16xf32>, vector<64x16xf32> -> vector<64x16xf32>
    %13 = vector.broadcast %4 : vector<1x16xf32> to vector<64x16xf32>
    %14 = arith.addf %12, %13 : vector<64x16xf32>
    %cst_11 = arith.constant 0.000000e+00 : f32
    %15 = vector.broadcast %cst_11 : f32 to vector<64x16xf32>
    %16 = arith.maximumf %14, %15 : vector<64x16xf32>
    %17 = vector.extract_strided_slice %3 {offsets = [0, 16], sizes = [1, 64], strides = [1, 1]} : vector<1x128xf32> to vector<1x64xf32>
    %cst_12 = arith.constant dense<0.000000e+00> : vector<64x16xf32>
    %18 = tpu.matmul %0, %16, %cst_12 {dimension_numbers = #tpu.dot_dimension_numbers<[1], [0], [0], [1], [0, 0, 1, 1], [], []>} : vector<64x64xf32>, vector<64x16xf32>, vector<64x16xf32> -> vector<64x16xf32>
    %cst_13 = arith.constant dense<0.000000e+00> : vector<64x16xf32>
    %19 = tpu.matmul %0, %18, %cst_13 {dimension_numbers = #tpu.dot_dimension_numbers<[1], [0], [0], [1], [0, 0, 1, 1], [], []>} : vector<64x64xf32>, vector<64x16xf32>, vector<64x16xf32> -> vector<64x16xf32>
    %cst_14 = arith.constant 2.000000e+00 : f32
    %20 = vector.broadcast %cst_14 : f32 to vector<64x16xf32>
    %21 = arith.mulf %20, %19 : vector<64x16xf32>
    %22 = arith.subf %21, %16 : vector<64x16xf32>
    %23 = tpu.concatenate %16, %18, %22 in 1 : vector<64x16xf32>, vector<64x16xf32>, vector<64x16xf32> -> vector<64x48xf32>
    %c0_15 = arith.constant 0 : index
    %c0_16 = arith.constant 0 : index
    %24 = vector.load %arg4[%c0_15, %c0_16] : memref<48x64xf32, #tpu.memory_space<vmem>>, vector<48x64xf32>
    %cst_17 = arith.constant dense<0.000000e+00> : vector<64x64xf32>
    %25 = tpu.matmul %23, %24, %cst_17 {dimension_numbers = #tpu.dot_dimension_numbers<[1], [0], [0], [1], [0, 0, 1, 1], [], []>} : vector<64x48xf32>, vector<48x64xf32>, vector<64x64xf32> -> vector<64x64xf32>
    %26 = vector.broadcast %17 : vector<1x64xf32> to vector<64x64xf32>
    %27 = arith.addf %25, %26 : vector<64x64xf32>
    %cst_18 = arith.constant 0.000000e+00 : f32
    %28 = vector.broadcast %cst_18 : f32 to vector<64x64xf32>
    %29 = arith.maximumf %27, %28 : vector<64x64xf32>
    %30 = vector.extract_strided_slice %3 {offsets = [0, 80], sizes = [1, 16], strides = [1, 1]} : vector<1x128xf32> to vector<1x16xf32>
    %cst_19 = arith.constant dense<0.000000e+00> : vector<64x64xf32>
    %31 = tpu.matmul %0, %29, %cst_19 {dimension_numbers = #tpu.dot_dimension_numbers<[1], [0], [0], [1], [0, 0, 1, 1], [], []>} : vector<64x64xf32>, vector<64x64xf32>, vector<64x64xf32> -> vector<64x64xf32>
    %cst_20 = arith.constant dense<0.000000e+00> : vector<64x64xf32>
    %32 = tpu.matmul %0, %31, %cst_20 {dimension_numbers = #tpu.dot_dimension_numbers<[1], [0], [0], [1], [0, 0, 1, 1], [], []>} : vector<64x64xf32>, vector<64x64xf32>, vector<64x64xf32> -> vector<64x64xf32>
    %cst_21 = arith.constant 2.000000e+00 : f32
    %33 = vector.broadcast %cst_21 : f32 to vector<64x64xf32>
    %34 = arith.mulf %33, %32 : vector<64x64xf32>
    %35 = arith.subf %34, %29 : vector<64x64xf32>
    %36 = tpu.concatenate %29, %31, %35 in 1 : vector<64x64xf32>, vector<64x64xf32>, vector<64x64xf32> -> vector<64x192xf32>
    %c0_22 = arith.constant 0 : index
    %c0_23 = arith.constant 0 : index
    %37 = vector.load %arg5[%c0_22, %c0_23] : memref<192x16xf32, #tpu.memory_space<vmem>>, vector<192x16xf32>
    %cst_24 = arith.constant dense<0.000000e+00> : vector<64x16xf32>
    %38 = tpu.matmul %36, %37, %cst_24 {dimension_numbers = #tpu.dot_dimension_numbers<[1], [0], [0], [1], [0, 0, 1, 1], [], []>} : vector<64x192xf32>, vector<192x16xf32>, vector<64x16xf32> -> vector<64x16xf32>
    %39 = vector.broadcast %30 : vector<1x16xf32> to vector<64x16xf32>
    %40 = arith.addf %38, %39 : vector<64x16xf32>
    %cst_25 = arith.constant 0.000000e+00 : f32
    %41 = vector.broadcast %cst_25 : f32 to vector<64x16xf32>
    %42 = arith.maximumf %40, %41 : vector<64x16xf32>
    %c0_26 = arith.constant 0 : index
    %c0_27 = arith.constant 0 : index
    %43 = vector.load %arg6[%c0_26, %c0_27] : memref<1x16xf32, #tpu.memory_space<vmem>>, vector<1x16xf32>
    %cst_28 = arith.constant dense<0.000000e+00> : vector<1x64xf32>
    %44 = tpu.matmul %43, %42, %cst_28 {dimension_numbers = #tpu.dot_dimension_numbers<[1], [1], [0], [0], [0, 0, 1, 0], [], []>} : vector<1x16xf32>, vector<64x16xf32>, vector<1x64xf32> -> vector<1x64xf32>
    %45 = vector.extract_strided_slice %3 {offsets = [0, 96], sizes = [1, 1], strides = [1, 1]} : vector<1x128xf32> to vector<1x1xf32>
    %46 = vector.broadcast %45 : vector<1x1xf32> to vector<1x64xf32>
    %47 = arith.addf %44, %46 : vector<1x64xf32>
    %c0_29 = arith.constant 0 : index
    %c0_30 = arith.constant 0 : index
    %c0_31 = arith.constant 0 : index
    %48 = vector.load %arg8[%c0_29, %c0_30, %c0_31] : memref<1x1x64xf32, #tpu.memory_space<vmem>>, vector<1x1x64xf32>
    %49 = vector.shape_cast %48 : vector<1x1x64xf32> to vector<1x64xf32>
    %50 = vector.shape_cast %47 : vector<1x64xf32> to vector<1x1x64xf32>
    tpu.vector_store %arg8[%c0_29, %c0_30, %c0_31], %50 {strides = array<i32>} : memref<1x1x64xf32, #tpu.memory_space<vmem>>, vector<1x1x64xf32>,
    return
  }
  func.func @transform_0(%arg0: i32) -> (i32, i32) {
    %c0_i32 = arith.constant 0 : i32
    %c0_i32_0 = arith.constant 0 : i32
    %c0_i32_1 = arith.constant 0 : i32
    return %c0_i32, %c0_i32_0 : i32, i32
  }
  func.func @transform_1(%arg0: i32) -> (i32, i32, i32) {
    %c0_i32 = arith.constant 0 : i32
    %c0_i32_0 = arith.constant 0 : i32
    %c0_i32_1 = arith.constant 0 : i32
    return %arg0, %c0_i32, %c0_i32_0 : i32, i32, i32
  }
  func.func @transform_2(%arg0: i32) -> (i32, i32) {
    %c0_i32 = arith.constant 0 : i32
    %c0_i32_0 = arith.constant 0 : i32
    %c0_i32_1 = arith.constant 0 : i32
    return %c0_i32, %c0_i32_0 : i32, i32
  }
  func.func @transform_3(%arg0: i32) -> (i32, i32) {
    %c0_i32 = arith.constant 0 : i32
    %c0_i32_0 = arith.constant 0 : i32
    %c0_i32_1 = arith.constant 0 : i32
    return %c0_i32, %c0_i32_0 : i32, i32
  }
  func.func @transform_4(%arg0: i32) -> (i32, i32) {
    %c0_i32 = arith.constant 0 : i32
    %c0_i32_0 = arith.constant 0 : i32
    %c0_i32_1 = arith.constant 0 : i32
    return %c0_i32, %c0_i32_0 : i32, i32
  }
  func.func @transform_5(%arg0: i32) -> (i32, i32) {
    %c0_i32 = arith.constant 0 : i32
    %c0_i32_0 = arith.constant 0 : i32
    %c0_i32_1 = arith.constant 0 : i32
    return %c0_i32, %c0_i32_0 : i32, i32
  }
  func.func @transform_6(%arg0: i32) -> (i32, i32) {
    %c0_i32 = arith.constant 0 : i32
    %c0_i32_0 = arith.constant 0 : i32
    %c0_i32_1 = arith.constant 0 : i32
    return %c0_i32, %c0_i32_0 : i32, i32
  }
  func.func @transform_7(%arg0: i32) -> (i32, i32, i32) {
    %c0_i32 = arith.constant 0 : i32
    %c0_i32_0 = arith.constant 0 : i32
    %c0_i32_1 = arith.constant 0 : i32
    return %arg0, %c0_i32, %c0_i32_0 : i32, i32, i32
  }
}

</mosaic_0001>

<llo_original>
// kernel: tpu_custom_call.1
$region0: #{tpu_custom_call.1}
  #allocation0 [shape = 'u32[]', space=smem, size = 0x4, offset = 0x4, fixed_abs, tag = 'smem constant byte address 0x4 - core index']
  #allocation1 [shape = 'u32[72,128]{1,0:T(1,128)}', space=vmem, size = 0x9000, scoped, tag = 'internal scratch']
  %s0 = inlined_call_operand.vmem [shape: f32[64,64], index: 0, kind: input, shape index: {}]
  %s1 = inlined_call_operand.vmem [shape: f32[2,64,1], index: 1, kind: input, shape index: {}]
  %s2 = inlined_call_operand.vmem [shape: f32[3,16], index: 2, kind: input, shape index: {}]
  %s3 = inlined_call_operand.vmem [shape: f32[48,64], index: 3, kind: input, shape index: {}]
  %s4 = inlined_call_operand.vmem [shape: f32[192,16], index: 4, kind: input, shape index: {}]
  %s5 = inlined_call_operand.vmem [shape: f32[1,16], index: 5, kind: input, shape index: {}]
  %s6 = inlined_call_operand.vmem [shape: f32[1,128], index: 6, kind: input, shape index: {}]
  %s7 = inlined_call_operand.hbm [shape: f32[2,1,64], index: 7, kind: output, shape index: {}]
  %s8 = sld [smem:[#allocation0]]
  $region61: #{tpu_custom_call.1} parent=0
    _
  %s10 = ssub.s32 1, %s8
  %s11 = scalar_select 0, %s10, %s8
  $region1: #{tpu_custom_call.1} parent=0
    #allocation2 [shape = 'u8[1024]{0}', space=vmem, size = 0x400, scoped, tag = 'output window, operand 0']
    #allocation3 [shape = 's32[2]{0}', space=sflag, size = 0x8, scoped, tag = 'scoped memory for tpu_custom_call.1']
    %12 = vsyncpa [#allocation3], 0
    %s13 = scalar_lea.sflag [#allocation3], 1
    %14 = vsyncpa %s13, 0
    loop: start=0, step=1, limit=4
    $region2: #{tpu_custom_call.1} parent=1 // loop_pre_header
      _
    $region3: #{tpu_custom_call.1} parent=1 // loop_header
      %s16 = sphi 0, %s20
      %p17 = scmp.ge.s32.totalorder %s16, 4
      %s24 = sphi 0, %s24
      %s26 = sphi 0, %s24
      %s27 = sphi 0, %s26
      %s41 = sphi 0, %s27
      %s47 = sphi 0, %s49
      %s50 = sphi 0, %s47
      %s51 = sphi 0, %s50
      %s67 = sphi 0, %s51
      %s71 = sphi 0, %s71
      %s73 = sphi 0, %s71
      %s74 = sphi 0, %s73
      %s88 = sphi 0, %s74
      %s92 = sphi 0, %s92
      %s94 = sphi 0, %s92
      %s95 = sphi 0, %s94
      %s109 = sphi 0, %s95
      %s113 = sphi 0, %s113
      %s115 = sphi 0, %s113
      %s116 = sphi 0, %s115
      %s130 = sphi 0, %s116
      %s134 = sphi 0, %s134
      %s136 = sphi 0, %s134
      %s137 = sphi 0, %s136
      %s151 = sphi 0, %s137
      %s155 = sphi 0, %s155
      %s157 = sphi 0, %s155
      %s158 = sphi 0, %s157
      %s172 = sphi 0, %s158
      %s178 = sphi 0, %s180
      %s181 = sphi 0, %s178
      %s182 = sphi 0, %s181
      %s198 = sphi 0, %s182
    $region4: #{tpu_custom_call.1} parent=1 // loop_header_branch
      %19 = sbr.rel (%p17) target = $region8
    $region5: #{tpu_custom_call.1} parent=1 // loop_body
      %s21 = ssub.s32 %s16, 1
      %s22 = ssub.s32 %s16, 2
      %s23 = sadd.s32 %s16, 1
      %s25 = sadd.s32 %s24, 1
      %p28 = scmp.eq.s32.totalorder %s16, 1
      %p29 = scmp.ne.s32.totalorder %s24, %s26
      %p30 = scmp.eq.s32.totalorder %s16, 0
      %p31 = por %p29, %p30
      %p32 = scmp.ne.s32.totalorder %s24, %s26
      %p33 = scmp.eq.s32.totalorder %s21, 1
      %p34 = por %p32, %p33
      %p35 = scmp.ne.s32.totalorder %s26, %s27
      %p36 = scmp.eq.s32.totalorder %s21, 0
      %p37 = por %p35, %p36
      %p38 = scmp.ne.s32.totalorder %s26, %s27
      %p39 = scmp.eq.s32.totalorder %s22, 1
      %p40 = por %p38, %p39
      %p42 = scmp.ne.s32.totalorder %s27, %s41
      %p43 = scmp.eq.s32.totalorder %s22, 0
      %p44 = por %p42, %p43
      %s45 = ssub.s32 %s16, %s23
      %p46 = scmp.eq.s32.totalorder %s45, 0
      %s48 = sadd.s32 %s47, 1
      %s49 = scalar_select %p46, %s47, %s48
      %p52 = pneg %p46
      %p53 = scmp.eq.s32.totalorder %s16, 1
      %p54 = por %p52, %p53
      %p55 = scmp.ne.s32.totalorder %s47, %s50
      %p56 = scmp.eq.s32.totalorder %s16, 0
      %p57 = por %p55, %p56
      %p58 = scmp.ne.s32.totalorder %s47, %s50
      %p59 = scmp.eq.s32.totalorder %s21, 1
      %p60 = por %p58, %p59
      %p61 = scmp.ne.s32.totalorder %s50, %s51
      %p62 = scmp.eq.s32.totalorder %s21, 0
      %p63 = por %p61, %p62
      %p64 = scmp.ne.s32.totalorder %s50, %s51
      %p65 = scmp.eq.s32.totalorder %s22, 1
      %p66 = por %p64, %p65
      %p68 = scmp.ne.s32.totalorder %s51, %s67
      %p69 = scmp.eq.s32.totalorder %s22, 0
      %p70 = por %p68, %p69
      %s72 = sadd.s32 %s71, 1
      %p75 = scmp.eq.s32.totalorder %s16, 1
      %p76 = scmp.ne.s32.totalorder %s71, %s73
      %p77 = scmp.eq.s32.totalorder %s16, 0
      %p78 = por %p76, %p77
      %p79 = scmp.ne.s32.totalorder %s71, %s73
      %p80 = scmp.eq.s32.totalorder %s21, 1
      %p81 = por %p79, %p80
      %p82 = scmp.ne.s32.totalorder %s73, %s74
      %p83 = scmp.eq.s32.totalorder %s21, 0
      %p84 = por %p82, %p83
      %p85 = scmp.ne.s32.totalorder %s73, %s74
      %p86 = scmp.eq.s32.totalorder %s22, 1
      %p87 = por %p85, %p86
      %p89 = scmp.ne.s32.totalorder %s74, %s88
      %p90 = scmp.eq.s32.totalorder %s22, 0
      %p91 = por %p89, %p90
      %s93 = sadd.s32 %s92, 1
      %p96 = scmp.eq.s32.totalorder %s16, 1
      %p97 = scmp.ne.s32.totalorder %s92, %s94
      %p98 = scmp.eq.s32.totalorder %s16, 0
      %p99 = por %p97, %p98
      %p100 = scmp.ne.s32.totalorder %s92, %s94
      %p101 = scmp.eq.s32.totalorder %s21, 1
      %p102 = por %p100, %p101
      %p103 = scmp.ne.s32.totalorder %s94, %s95
      %p104 = scmp.eq.s32.totalorder %s21, 0
      %p105 = por %p103, %p104
      %p106 = scmp.ne.s32.totalorder %s94, %s95
      %p107 = scmp.eq.s32.totalorder %s22, 1
      %p108 = por %p106, %p107
      %p110 = scmp.ne.s32.totalorder %s95, %s109
      %p111 = scmp.eq.s32.totalorder %s22, 0
      %p112 = por %p110, %p111
      %s114 = sadd.s32 %s113, 1
      %p117 = scmp.eq.s32.totalorder %s16, 1
      %p118 = scmp.ne.s32.totalorder %s113, %s115
      %p119 = scmp.eq.s32.totalorder %s16, 0
      %p120 = por %p118, %p119
      %p121 = scmp.ne.s32.totalorder %s113, %s115
      %p122 = scmp.eq.s32.totalorder %s21, 1
      %p123 = por %p121, %p122
      %p124 = scmp.ne.s32.totalorder %s115, %s116
      %p125 = scmp.eq.s32.totalorder %s21, 0
      %p126 = por %p124, %p125
      %p127 = scmp.ne.s32.totalorder %s115, %s116
      %p128 = scmp.eq.s32.totalorder %s22, 1
      %p129 = por %p127, %p128
      %p131 = scmp.ne.s32.totalorder %s116, %s130
      %p132 = scmp.eq.s32.totalorder %s22, 0
      %p133 = por %p131, %p132
      %s135 = sadd.s32 %s134, 1
      %p138 = scmp.eq.s32.totalorder %s16, 1
      %p139 = scmp.ne.s32.totalorder %s134, %s136
      %p140 = scmp.eq.s32.totalorder %s16, 0
      %p141 = por %p139, %p140
      %p142 = scmp.ne.s32.totalorder %s134, %s136
      %p143 = scmp.eq.s32.totalorder %s21, 1
      %p144 = por %p142, %p143
      %p145 = scmp.ne.s32.totalorder %s136, %s137
      %p146 = scmp.eq.s32.totalorder %s21, 0
      %p147 = por %p145, %p146
      %p148 = scmp.ne.s32.totalorder %s136, %s137
      %p149 = scmp.eq.s32.totalorder %s22, 1
      %p150 = por %p148, %p149
      %p152 = scmp.ne.s32.totalorder %s137, %s151
      %p153 = scmp.eq.s32.totalorder %s22, 0
      %p154 = por %p152, %p153
      %s156 = sadd.s32 %s155, 1
      %p159 = scmp.eq.s32.totalorder %s16, 1
      %p160 = scmp.ne.s32.totalorder %s155, %s157
      %p161 = scmp.eq.s32.totalorder %s16, 0
      %p162 = por %p160, %p161
      %p163 = scmp.ne.s32.totalorder %s155, %s157
      %p164 = scmp.eq.s32.totalorder %s21, 1
      %p165 = por %p163, %p164
      %p166 = scmp.ne.s32.totalorder %s157, %s158
      %p167 = scmp.eq.s32.totalorder %s21, 0
      %p168 = por %p166, %p167
      %p169 = scmp.ne.s32.totalorder %s157, %s158
      %p170 = scmp.eq.s32.totalorder %s22, 1
      %p171 = por %p169, %p170
      %p173 = scmp.ne.s32.totalorder %s158, %s172
      %p174 = scmp.eq.s32.totalorder %s22, 0
      %p175 = por %p173, %p174
      %s176 = ssub.s32 %s16, %s23
      %p177 = scmp.eq.s32.totalorder %s176, 0
      %s179 = sadd.s32 %s178, 1
      %s180 = scalar_select %p177, %s178, %s179
      %p183 = pneg %p177
      %p184 = scmp.eq.s32.totalorder %s16, 1
      %p185 = por %p183, %p184
      %p186 = scmp.ne.s32.totalorder %s178, %s181
      %p187 = scmp.eq.s32.totalorder %s16, 0
      %p188 = por %p186, %p187
      %p189 = scmp.ne.s32.totalorder %s178, %s181
      %p190 = scmp.eq.s32.totalorder %s21, 1
      %p191 = por %p189, %p190
      %p192 = scmp.ne.s32.totalorder %s181, %s182
      %p193 = scmp.eq.s32.totalorder %s21, 0
      %p194 = por %p192, %p193
      %p195 = scmp.ne.s32.totalorder %s181, %s182
      %p196 = scmp.eq.s32.totalorder %s22, 1
      %p197 = por %p195, %p196
      %p199 = scmp.ne.s32.totalorder %s182, %s198
      %p200 = scmp.eq.s32.totalorder %s22, 0
      %p201 = por %p199, %p200
      %p202 = scmp.le.s32.totalorder 1, %s16
      %p203 = scmp.lt.s32.totalorder %s16, 3
      %p204 = pnand %p202, %p203
      %p205 = pneg %p204
      // Predicated region
      $region9: #{tpu_custom_call.1} parent=5 // pred_check
        _
      $region10: #{tpu_custom_call.1} parent=5 // pred_check_branch
        %207 = sbr.rel (%p204) target = $region12
      $region11: #{tpu_custom_call.1} parent=5 // pred_region
        %s208 = ssub.s32 %s16, 1
        // Predicated region
        $region13: #{tpu_custom_call.1} parent=11 // pred_check
          %p209 = pneg %p37
        $region14: #{tpu_custom_call.1} parent=11 // pred_check_branch
          %211 = sbr.rel (%p209) target = $region16
        $region15: #{tpu_custom_call.1} parent=11 // pred_region
          _
        $region16: #{tpu_custom_call.1} parent=11 // pred_fallthru
          _
        // Predicated region
        $region17: #{tpu_custom_call.1} parent=11 // pred_check
          %p212 = pneg %p84
        $region18: #{tpu_custom_call.1} parent=11 // pred_check_branch
          %214 = sbr.rel (%p212) target = $region20
        $region19: #{tpu_custom_call.1} parent=11 // pred_region
          _
        $region20: #{tpu_custom_call.1} parent=11 // pred_fallthru
          _
        // Predicated region
        $region21: #{tpu_custom_call.1} parent=11 // pred_check
          %p215 = pneg %p105
        $region22: #{tpu_custom_call.1} parent=11 // pred_check_branch
          %217 = sbr.rel (%p215) target = $region24
        $region23: #{tpu_custom_call.1} parent=11 // pred_region
          _
        $region24: #{tpu_custom_call.1} parent=11 // pred_fallthru
          _
        // Predicated region
        $region25: #{tpu_custom_call.1} parent=11 // pred_check
          %p218 = pneg %p126
        $region26: #{tpu_custom_call.1} parent=11 // pred_check_branch
          %220 = sbr.rel (%p218) target = $region28
        $region27: #{tpu_custom_call.1} parent=11 // pred_region
          _
        $region28: #{tpu_custom_call.1} parent=11 // pred_fallthru
          _
        // Predicated region
        $region29: #{tpu_custom_call.1} parent=11 // pred_check
          %p221 = pneg %p147
        $region30: #{tpu_custom_call.1} parent=11 // pred_check_branch
          %223 = sbr.rel (%p221) target = $region32
        $region31: #{tpu_custom_call.1} parent=11 // pred_region
          _
        $region32: #{tpu_custom_call.1} parent=11 // pred_fallthru
          _
        // Predicated region
        $region33: #{tpu_custom_call.1} parent=11 // pred_check
          %p224 = pneg %p168
        $region34: #{tpu_custom_call.1} parent=11 // pred_check_branch
          %226 = sbr.rel (%p224) target = $region36
        $region35: #{tpu_custom_call.1} parent=11 // pred_region
          _
        $region36: #{tpu_custom_call.1} parent=11 // pred_fallthru
          _
      $region12: #{tpu_custom_call.1} parent=5 // pred_fallthru
        _
      %p227 = scmp.lt.s32.totalorder %s16, 2
      // Predicated region
      $region37: #{tpu_custom_call.1} parent=5 // pred_check
        %p228 = pneg %p227
      $region38: #{tpu_custom_call.1} parent=5 // pred_check_branch
        %230 = sbr.rel (%p228) target = $region40
      $region39: #{tpu_custom_call.1} parent=5 // pred_region
        // Predicated region
        $region41: #{tpu_custom_call.1} parent=39 // pred_check
          %p231 = pneg %p57
        $region42: #{tpu_custom_call.1} parent=39 // pred_check_branch
          %233 = sbr.rel (%p231) target = $region44
        $region43: #{tpu_custom_call.1} parent=39 // pred_region
          %p234 = scmp.lt.s32.totalorder %s16, 1
          %s235 = scalar_select %p234, %s16, 1
          %s236 = smul.addr %s235, 8
          %s237 = smul.addr %s236, 8
          %s238 = scalar_lea.vmem %s1, %s237
        $region44: #{tpu_custom_call.1} parent=39 // pred_fallthru
          _
      $region40: #{tpu_custom_call.1} parent=5 // pred_fallthru
        _
      %p239 = scmp.le.s32.totalorder 1, %s16
      %p240 = scmp.lt.s32.totalorder %s16, 3
      %p241 = pnand %p239, %p240
      %p242 = pneg %p241
      // Predicated region
      $region45: #{tpu_custom_call.1} parent=5 // pred_check
        _
      $region46: #{tpu_custom_call.1} parent=5 // pred_check_branch
        %244 = sbr.rel (%p241) target = $region48
      $region47: #{tpu_custom_call.1} parent=5 // pred_region
        %s245 = ssub.s32 %s16, 1
        %p246 = pneg %p37
        %p247 = pneg %p34
        %p248 = scmp.lt.s32.totalorder %s21, 1
        %s249 = scalar_select %p248, %s21, 1
        %s250 = smul.addr %s249, 8
        %s251 = smul.addr %s250, 8
        %s252 = scalar_lea.vmem %s1, %s251
        %p253 = pneg %p63
        %p254 = pneg %p60
        %p255 = pneg %p84
        %p256 = pneg %p81
        %p257 = pneg %p105
        %p258 = pneg %p102
        %p259 = pneg %p126
        %p260 = pneg %p123
        %p261 = pneg %p147
        %p262 = pneg %p144
        %p263 = pneg %p168
        %p264 = pneg %p165
        %p265 = pneg %p194
        %p266 = pneg %p191
        %s267 = sand.u32 %s181, 1
        %s268 = scalar_lea.sflag [#allocation3], %s267
        %s269 = sand.u32 %s181, 1
        %s270 = scalar_lea.vmem [#allocation2], %s269
        %p271 = scmp.lt.s32.totalorder %s21, 1
        %s272 = scalar_select %p271, %s21, 1
        %s273 = smul.addr %s272, 8
        %s274 = smul.addr %s273, 8
        %s275 = scalar_lea.vmem %s1, %s274
        %v276 = vld [vmem:[%s0] sm:$0xff]
        %v277 = vld [vmem:[%s0 + $0x8] sm:$0xff]
        %v278 = vld [vmem:[%s0 + $0x10] sm:$0xff]
        %v279 = vld [vmem:[%s0 + $0x18] sm:$0xff]
        %v280 = vld [vmem:[%s0 + $0x20] sm:$0xff]
        %v281 = vld [vmem:[%s0 + $0x28] sm:$0xff]
        %v282 = vld [vmem:[%s0 + $0x30] sm:$0xff]
        %v283 = vld [vmem:[%s0 + $0x38] sm:$0xff]
        %v284 = vld [vmem:[%s275] sm:$0xff]
        %v285 = vld [vmem:[%s275 + $0x8] sm:$0xff]
        %v286 = vld [vmem:[%s275 + $0x10] sm:$0xff]
        %v287 = vld [vmem:[%s275 + $0x18] sm:$0xff]
        %v288 = vld [vmem:[%s275 + $0x20] sm:$0xff]
        %v289 = vld [vmem:[%s275 + $0x28] sm:$0xff]
        %v290 = vld [vmem:[%s275 + $0x30] sm:$0xff]
        %v291 = vld [vmem:[%s275 + $0x38] sm:$0xff]
        %v292 = vld [vmem:[%s6] sm:$0x1]
        %vm293 = vcmask 523264
        %v295 = vsel %vm293, %v276, 0
        %v298 = vsel %vm293, %v277, 0
        %v301 = vsel %vm293, %v278, 0
        %v304 = vsel %vm293, %v279, 0
        %v307 = vsel %vm293, %v280, 0
        %v310 = vsel %vm293, %v281, 0
        %v313 = vsel %vm293, %v282, 0
        %v316 = vsel %vm293, %v283, 0
        %318 = vmatpush.msra.mxu0 0.0
        %319 = vmatpush.msra.mxu0 0.0
        %320 = vmatpush.msra.mxu0 0.0
        %321 = vmatpush.msra.mxu0 0.0
        %322 = vmatpush.msra.mxu0 0.0
        %323 = vmatpush.msra.mxu0 0.0
        %324 = vmatpush.msra.mxu0 0.0
        %325 = vmatpush.msra.mxu0 0.0
        %326 = vmatpush.msra.mxu0 %v291
        %327 = vmatpush.msra.mxu0 %v290
        %328 = vmatpush.msra.mxu0 %v289
        %329 = vmatpush.msra.mxu0 %v288
        %330 = vmatpush.msra.mxu0 %v287
        %331 = vmatpush.msra.mxu0 %v286
        %332 = vmatpush.msra.mxu0 %v285
        %333 = vmatpush.msra.mxu0 %v284
        %334 = vmatmul.f32.gmra.mxu0 %v295
        %v335 = vpop.f32.mrf.mxu0
        %v336 = vadd.f32 0.0, %v335
        %337 = vmatmul.f32.gmra.mxu0 %v298
        %v338 = vpop.f32.mrf.mxu0
        %v339 = vadd.f32 0.0, %v338
        %340 = vmatmul.f32.gmra.mxu0 %v301
        %v341 = vpop.f32.mrf.mxu0
        %v342 = vadd.f32 0.0, %v341
        %343 = vmatmul.f32.gmra.mxu0 %v304
        %v344 = vpop.f32.mrf.mxu0
        %v345 = vadd.f32 0.0, %v344
        %346 = vmatmul.f32.gmra.mxu0 %v307
        %v347 = vpop.f32.mrf.mxu0
        %v348 = vadd.f32 0.0, %v347
        %349 = vmatmul.f32.gmra.mxu0 %v310
        %v350 = vpop.f32.mrf.mxu0
        %v351 = vadd.f32 0.0, %v350
        %352 = vmatmul.f32.gmra.mxu0 %v313
        %v353 = vpop.f32.mrf.mxu0
        %v354 = vadd.f32 0.0, %v353
        %355 = vmatmul.f32.gmra.mxu0 %v316
        %v356 = vpop.f32.mrf.mxu0
        %v357 = vadd.f32 0.0, %v356
        %358 = vdwg.mxu0
        %359 = vmatpush.msra.mxu0 0.0
        %360 = vmatpush.msra.mxu0 0.0
        %361 = vmatpush.msra.mxu0 0.0
        %362 = vmatpush.msra.mxu0 0.0
        %363 = vmatpush.msra.mxu0 0.0
        %364 = vmatpush.msra.mxu0 0.0
        %365 = vmatpush.msra.mxu0 0.0
        %366 = vmatpush.msra.mxu0 0.0
        %367 = vmatpush.msra.mxu0 %v357
        %368 = vmatpush.msra.mxu0 %v354
        %369 = vmatpush.msra.mxu0 %v351
        %370 = vmatpush.msra.mxu0 %v348
        %371 = vmatpush.msra.mxu0 %v345
        %372 = vmatpush.msra.mxu0 %v342
        %373 = vmatpush.msra.mxu0 %v339
        %374 = vmatpush.msra.mxu0 %v336
        %375 = vmatmul.f32.gmra.mxu0 %v295
        %v376 = vpop.f32.mrf.mxu0
        %v377 = vadd.f32 0.0, %v376
        %378 = vmatmul.f32.gmra.mxu0 %v298
        %v379 = vpop.f32.mrf.mxu0
        %v380 = vadd.f32 0.0, %v379
        %381 = vmatmul.f32.gmra.mxu0 %v301
        %v382 = vpop.f32.mrf.mxu0
        %v383 = vadd.f32 0.0, %v382
        %384 = vmatmul.f32.gmra.mxu0 %v304
        %v385 = vpop.f32.mrf.mxu0
        %v386 = vadd.f32 0.0, %v385
        %387 = vmatmul.f32.gmra.mxu0 %v307
        %v388 = vpop.f32.mrf.mxu0
        %v389 = vadd.f32 0.0, %v388
        %390 = vmatmul.f32.gmra.mxu0 %v310
        %v391 = vpop.f32.mrf.mxu0
        %v392 = vadd.f32 0.0, %v391
        %393 = vmatmul.f32.gmra.mxu0 %v313
        %v394 = vpop.f32.mrf.mxu0
        %v395 = vadd.f32 0.0, %v394
        %396 = vmatmul.f32.gmra.mxu0 %v316
        %v397 = vpop.f32.mrf.mxu0
        %v398 = vadd.f32 0.0, %v397
        %399 = vdwg.mxu0
        %v400 = vmul.f32 %v377, 2.0
        %v401 = vmul.f32 %v380, 2.0
        %v402 = vmul.f32 %v383, 2.0
        %v403 = vmul.f32 %v386, 2.0
        %v404 = vmul.f32 %v389, 2.0
        %v405 = vmul.f32 %v392, 2.0
        %v406 = vmul.f32 %v395, 2.0
        %v407 = vmul.f32 %v398, 2.0
        %v408 = vsub.f32 %v400, %v284
        %v409 = vsub.f32 %v401, %v285
        %v410 = vsub.f32 %v402, %v286
        %v411 = vsub.f32 %v403, %v287
        %v412 = vsub.f32 %v404, %v288
        %v413 = vsub.f32 %v405, %v289
        %v414 = vsub.f32 %v406, %v290
        %v415 = vsub.f32 %v407, %v291
        %424 = vrot.lane.b32.xlu0 %v336, 1
        %v425 = vpop.permute.xlu0 %424
        %426 = vrot.lane.b32.xlu0 %v339, 1
        %v427 = vpop.permute.xlu0 %426
        %428 = vrot.lane.b32.xlu0 %v342, 1
        %v429 = vpop.permute.xlu0 %428
        %430 = vrot.lane.b32.xlu0 %v345, 1
        %v431 = vpop.permute.xlu0 %430
        %432 = vrot.lane.b32.xlu0 %v348, 1
        %v433 = vpop.permute.xlu0 %432
        %434 = vrot.lane.b32.xlu0 %v351, 1
        %v435 = vpop.permute.xlu0 %434
        %436 = vrot.lane.b32.xlu0 %v354, 1
        %v437 = vpop.permute.xlu0 %436
        %438 = vrot.lane.b32.xlu0 %v357, 1
        %v439 = vpop.permute.xlu0 %438
        %456 = vrot.lane.b32.xlu0 %v408, 2
        %v457 = vpop.permute.xlu0 %456
        %458 = vrot.lane.b32.xlu0 %v409, 2
        %v459 = vpop.permute.xlu0 %458
        %460 = vrot.lane.b32.xlu0 %v410, 2
        %v461 = vpop.permute.xlu0 %460
        %462 = vrot.lane.b32.xlu0 %v411, 2
        %v463 = vpop.permute.xlu0 %462
        %464 = vrot.lane.b32.xlu0 %v412, 2
        %v465 = vpop.permute.xlu0 %464
        %466 = vrot.lane.b32.xlu0 %v413, 2
        %v467 = vpop.permute.xlu0 %466
        %468 = vrot.lane.b32.xlu0 %v414, 2
        %v469 = vpop.permute.xlu0 %468
        %470 = vrot.lane.b32.xlu0 %v415, 2
        %v471 = vpop.permute.xlu0 %470
        %vm480 = vcmask 7168
        %v481 = vsel %vm480, %v284, %v425
        %v482 = vsel %vm480, %v285, %v427
        %v483 = vsel %vm480, %v286, %v429
        %v484 = vsel %vm480, %v287, %v431
        %v485 = vsel %vm480, %v288, %v433
        %v486 = vsel %vm480, %v289, %v435
        %v487 = vsel %vm480, %v290, %v437
        %v488 = vsel %vm480, %v291, %v439
        %vm489 = vcmask 15360
        %v490 = vsel %vm489, %v481, %v457
        %v491 = vsel %vm489, %v482, %v459
        %v492 = vsel %vm489, %v483, %v461
        %v493 = vsel %vm489, %v484, %v463
        %v494 = vsel %vm489, %v485, %v465
        %v495 = vsel %vm489, %v486, %v467
        %v496 = vsel %vm489, %v487, %v469
        %v497 = vsel %vm489, %v488, %v471
        %v498 = vld [vmem:[%s2] sm:$0x7]
        %v500 = vperm.slane %v292, 0
        %vm502 = vcmask 23552
        %v504 = vsel %vm502, %v490, 0
        %v507 = vsel %vm502, %v491, 0
        %v510 = vsel %vm502, %v492, 0
        %v513 = vsel %vm502, %v493, 0
        %v516 = vsel %vm502, %v494, 0
        %v519 = vsel %vm502, %v495, 0
        %v522 = vsel %vm502, %v496, 0
        %v525 = vsel %vm502, %v497, 0
        %vm527 = vcmask 1042432
        %v529 = vsel %vm527, %v498, 0
        %531 = vmatpush.msra.mxu0 0.0
        %532 = vmatpush.msra.mxu0 0.0
        %533 = vmatpush.msra.mxu0 0.0
        %534 = vmatpush.msra.mxu0 0.0
        %535 = vmatpush.msra.mxu0 0.0
        %536 = vmatpush.msra.mxu0 0.0
        %537 = vmatpush.msra.mxu0 0.0
        %538 = vmatpush.msra.mxu0 0.0
        %539 = vmatpush.msra.mxu0 0.0
        %540 = vmatpush.msra.mxu0 0.0
        %541 = vmatpush.msra.mxu0 0.0
        %542 = vmatpush.msra.mxu0 0.0
        %543 = vmatpush.msra.mxu0 0.0
        %544 = vmatpush.msra.mxu0 0.0
        %545 = vmatpush.msra.mxu0 0.0
        %546 = vmatpush.msra.mxu0 %v529
        %547 = vmatmul.f32.gmra.mxu0 %v504
        %v548 = vpop.f32.mrf.mxu0
        %v549 = vadd.f32 %v500, %v548
        %550 = vmatmul.f32.gmra.mxu0 %v507
        %v551 = vpop.f32.mrf.mxu0
        %v552 = vadd.f32 %v500, %v551
        %553 = vmatmul.f32.gmra.mxu0 %v510
        %v554 = vpop.f32.mrf.mxu0
        %v555 = vadd.f32 %v500, %v554
        %556 = vmatmul.f32.gmra.mxu0 %v513
        %v557 = vpop.f32.mrf.mxu0
        %v558 = vadd.f32 %v500, %v557
        %559 = vmatmul.f32.gmra.mxu0 %v516
        %v560 = vpop.f32.mrf.mxu0
        %v561 = vadd.f32 %v500, %v560
        %562 = vmatmul.f32.gmra.mxu0 %v519
        %v563 = vpop.f32.mrf.mxu0
        %v564 = vadd.f32 %v500, %v563
        %565 = vmatmul.f32.gmra.mxu0 %v522
        %v566 = vpop.f32.mrf.mxu0
        %v567 = vadd.f32 %v500, %v566
        %568 = vmatmul.f32.gmra.mxu0 %v525
        %v569 = vpop.f32.mrf.mxu0
        %v570 = vadd.f32 %v500, %v569
        %571 = vdwg.mxu0
        %v572 = vmax.f32 %v549, 0.0
        %v573 = vmax.f32 %v552, 0.0
        %v574 = vmax.f32 %v555, 0.0
        %v575 = vmax.f32 %v558, 0.0
        %v576 = vmax.f32 %v561, 0.0
        %v577 = vmax.f32 %v564, 0.0
        %v578 = vmax.f32 %v567, 0.0
        %v579 = vmax.f32 %v570, 0.0
        %580 = vmatpush.msra.mxu0 0.0
        %581 = vmatpush.msra.mxu0 0.0
        %582 = vmatpush.msra.mxu0 0.0
        %583 = vmatpush.msra.mxu0 0.0
        %584 = vmatpush.msra.mxu0 0.0
        %585 = vmatpush.msra.mxu0 0.0
        %586 = vmatpush.msra.mxu0 0.0
        %587 = vmatpush.msra.mxu0 0.0
        %588 = vmatpush.msra.mxu0 %v579
        %589 = vmatpush.msra.mxu0 %v578
        %590 = vmatpush.msra.mxu0 %v577
        %591 = vmatpush.msra.mxu0 %v576
        %592 = vmatpush.msra.mxu0 %v575
        %593 = vmatpush.msra.mxu0 %v574
        %594 = vmatpush.msra.mxu0 %v573
        %595 = vmatpush.msra.mxu0 %v572
        %596 = vmatmul.f32.gmra.mxu0 %v295
        %v597 = vpop.f32.mrf.mxu0
        %v598 = vadd.f32 0.0, %v597
        %599 = vmatmul.f32.gmra.mxu0 %v298
        %v600 = vpop.f32.mrf.mxu0
        %v601 = vadd.f32 0.0, %v600
        %602 = vmatmul.f32.gmra.mxu0 %v301
        %v603 = vpop.f32.mrf.mxu0
        %v604 = vadd.f32 0.0, %v603
        %605 = vmatmul.f32.gmra.mxu0 %v304
        %v606 = vpop.f32.mrf.mxu0
        %v607 = vadd.f32 0.0, %v606
        %608 = vmatmul.f32.gmra.mxu0 %v307
        %v609 = vpop.f32.mrf.mxu0
        %v610 = vadd.f32 0.0, %v609
        %611 = vmatmul.f32.gmra.mxu0 %v310
        %v612 = vpop.f32.mrf.mxu0
        %v613 = vadd.f32 0.0, %v612
        %614 = vmatmul.f32.gmra.mxu0 %v313
        %v615 = vpop.f32.mrf.mxu0
        %v616 = vadd.f32 0.0, %v615
        %617 = vmatmul.f32.gmra.mxu0 %v316
        %v618 = vpop.f32.mrf.mxu0
        %v619 = vadd.f32 0.0, %v618
        %620 = vdwg.mxu0
        %621 = vmatpush.msra.mxu0 0.0
        %622 = vmatpush.msra.mxu0 0.0
        %623 = vmatpush.msra.mxu0 0.0
        %624 = vmatpush.msra.mxu0 0.0
        %625 = vmatpush.msra.mxu0 0.0
        %626 = vmatpush.msra.mxu0 0.0
        %627 = vmatpush.msra.mxu0 0.0
        %628 = vmatpush.msra.mxu0 0.0
        %629 = vmatpush.msra.mxu0 %v619
        %630 = vmatpush.msra.mxu0 %v616
        %631 = vmatpush.msra.mxu0 %v613
        %632 = vmatpush.msra.mxu0 %v610
        %633 = vmatpush.msra.mxu0 %v607
        %634 = vmatpush.msra.mxu0 %v604
        %635 = vmatpush.msra.mxu0 %v601
        %636 = vmatpush.msra.mxu0 %v598
        %637 = vmatmul.f32.gmra.mxu0 %v295
        %v638 = vpop.f32.mrf.mxu0
        %v639 = vadd.f32 0.0, %v638
        %640 = vmatmul.f32.gmra.mxu0 %v298
        %v641 = vpop.f32.mrf.mxu0
        %v642 = vadd.f32 0.0, %v641
        %643 = vmatmul.f32.gmra.mxu0 %v301
        %v644 = vpop.f32.mrf.mxu0
        %v645 = vadd.f32 0.0, %v644
        %646 = vmatmul.f32.gmra.mxu0 %v304
        %v647 = vpop.f32.mrf.mxu0
        %v648 = vadd.f32 0.0, %v647
        %649 = vmatmul.f32.gmra.mxu0 %v307
        %v650 = vpop.f32.mrf.mxu0
        %v651 = vadd.f32 0.0, %v650
        %652 = vmatmul.f32.gmra.mxu0 %v310
        %v653 = vpop.f32.mrf.mxu0
        %v654 = vadd.f32 0.0, %v653
        %655 = vmatmul.f32.gmra.mxu0 %v313
        %v656 = vpop.f32.mrf.mxu0
        %v657 = vadd.f32 0.0, %v656
        %658 = vmatmul.f32.gmra.mxu0 %v316
        %v659 = vpop.f32.mrf.mxu0
        %v660 = vadd.f32 0.0, %v659
        %661 = vdwg.mxu0
        %v662 = vmul.f32 %v639, 2.0
        %v663 = vmul.f32 %v642, 2.0
        %v664 = vmul.f32 %v645, 2.0
        %v665 = vmul.f32 %v648, 2.0
        %v666 = vmul.f32 %v651, 2.0
        %v667 = vmul.f32 %v654, 2.0
        %v668 = vmul.f32 %v657, 2.0
        %v669 = vmul.f32 %v660, 2.0
        %v670 = vsub.f32 %v662, %v572
        %v671 = vsub.f32 %v663, %v573
        %v672 = vsub.f32 %v664, %v574
        %v673 = vsub.f32 %v665, %v575
        %v674 = vsub.f32 %v666, %v576
        %v675 = vsub.f32 %v667, %v577
        %v676 = vsub.f32 %v668, %v578
        %v677 = vsub.f32 %v669, %v579
        %686 = vrot.lane.b32.xlu0 %v598, 16
        %v687 = vpop.permute.xlu0 %686
        %688 = vrot.lane.b32.xlu0 %v601, 16
        %v689 = vpop.permute.xlu0 %688
        %690 = vrot.lane.b32.xlu0 %v604, 16
        %v691 = vpop.permute.xlu0 %690
        %692 = vrot.lane.b32.xlu0 %v607, 16
        %v693 = vpop.permute.xlu0 %692
        %694 = vrot.lane.b32.xlu0 %v610, 16
        %v695 = vpop.permute.xlu0 %694
        %696 = vrot.lane.b32.xlu0 %v613, 16
        %v697 = vpop.permute.xlu0 %696
        %698 = vrot.lane.b32.xlu0 %v616, 16
        %v699 = vpop.permute.xlu0 %698
        %700 = vrot.lane.b32.xlu0 %v619, 16
        %v701 = vpop.permute.xlu0 %700
        %718 = vrot.lane.b32.xlu0 %v670, 32
        %v719 = vpop.permute.xlu0 %718
        %720 = vrot.lane.b32.xlu0 %v671, 32
        %v721 = vpop.permute.xlu0 %720
        %722 = vrot.lane.b32.xlu0 %v672, 32
        %v723 = vpop.permute.xlu0 %722
        %724 = vrot.lane.b32.xlu0 %v673, 32
        %v725 = vpop.permute.xlu0 %724
        %726 = vrot.lane.b32.xlu0 %v674, 32
        %v727 = vpop.permute.xlu0 %726
        %728 = vrot.lane.b32.xlu0 %v675, 32
        %v729 = vpop.permute.xlu0 %728
        %730 = vrot.lane.b32.xlu0 %v676, 32
        %v731 = vpop.permute.xlu0 %730
        %732 = vrot.lane.b32.xlu0 %v677, 32
        %v733 = vpop.permute.xlu0 %732
        %vm742 = vcmask 130048
        %v743 = vsel %vm742, %v572, %v687
        %v744 = vsel %vm742, %v573, %v689
        %v745 = vsel %vm742, %v574, %v691
        %v746 = vsel %vm742, %v575, %v693
        %v747 = vsel %vm742, %v576, %v695
        %v748 = vsel %vm742, %v577, %v697
        %v749 = vsel %vm742, %v578, %v699
        %v750 = vsel %vm742, %v579, %v701
        %vm751 = vcmask 261120
        %v752 = vsel %vm751, %v743, %v719
        %v753 = vsel %vm751, %v744, %v721
        %v754 = vsel %vm751, %v745, %v723
        %v755 = vsel %vm751, %v746, %v725
        %v756 = vsel %vm751, %v747, %v727
        %v757 = vsel %vm751, %v748, %v729
        %v758 = vsel %vm751, %v749, %v731
        %v759 = vsel %vm751, %v750, %v733
        %v760 = vld [vmem:[%s3] sm:$0xff]
        %v761 = vld [vmem:[%s3 + $0x8] sm:$0xff]
        %v762 = vld [vmem:[%s3 + $0x10] sm:$0xff]
        %v763 = vld [vmem:[%s3 + $0x18] sm:$0xff]
        %v764 = vld [vmem:[%s3 + $0x20] sm:$0xff]
        %v765 = vld [vmem:[%s3 + $0x28] sm:$0xff]
        %766 = vrot.lane.b32.xlu0 %v500, 112
        %v767 = vpop.permute.xlu0 %766
        %vm769 = vcmask 392192
        %v771 = vsel %vm769, %v752, 0
        %v774 = vsel %vm769, %v753, 0
        %v777 = vsel %vm769, %v754, 0
        %v780 = vsel %vm769, %v755, 0
        %v783 = vsel %vm769, %v756, 0
        %v786 = vsel %vm769, %v757, 0
        %v789 = vsel %vm769, %v758, 0
        %v792 = vsel %vm769, %v759, 0
        %794 = vmatpush.msra.mxu0 0.0
        %795 = vmatpush.msra.mxu0 0.0
        %796 = vmatpush.msra.mxu0 0.0
        %797 = vmatpush.msra.mxu0 0.0
        %798 = vmatpush.msra.mxu0 0.0
        %799 = vmatpush.msra.mxu0 0.0
        %800 = vmatpush.msra.mxu0 0.0
        %801 = vmatpush.msra.mxu0 0.0
        %802 = vmatpush.msra.mxu0 0.0
        %803 = vmatpush.msra.mxu0 0.0
        %804 = vmatpush.msra.mxu0 %v765
        %805 = vmatpush.msra.mxu0 %v764
        %806 = vmatpush.msra.mxu0 %v763
        %807 = vmatpush.msra.mxu0 %v762
        %808 = vmatpush.msra.mxu0 %v761
        %809 = vmatpush.msra.mxu0 %v760
        %810 = vmatmul.f32.gmra.mxu0 %v771
        %v811 = vpop.f32.mrf.mxu0
        %v812 = vadd.f32 %v767, %v811
        %813 = vmatmul.f32.gmra.mxu0 %v774
        %v814 = vpop.f32.mrf.mxu0
        %v815 = vadd.f32 %v767, %v814
        %816 = vmatmul.f32.gmra.mxu0 %v777
        %v817 = vpop.f32.mrf.mxu0
        %v818 = vadd.f32 %v767, %v817
        %819 = vmatmul.f32.gmra.mxu0 %v780
        %v820 = vpop.f32.mrf.mxu0
        %v821 = vadd.f32 %v767, %v820
        %822 = vmatmul.f32.gmra.mxu0 %v783
        %v823 = vpop.f32.mrf.mxu0
        %v824 = vadd.f32 %v767, %v823
        %825 = vmatmul.f32.gmra.mxu0 %v786
        %v826 = vpop.f32.mrf.mxu0
        %v827 = vadd.f32 %v767, %v826
        %828 = vmatmul.f32.gmra.mxu0 %v789
        %v829 = vpop.f32.mrf.mxu0
        %v830 = vadd.f32 %v767, %v829
        %831 = vmatmul.f32.gmra.mxu0 %v792
        %v832 = vpop.f32.mrf.mxu0
        %v833 = vadd.f32 %v767, %v832
        %834 = vdwg.mxu0
        %v835 = vmax.f32 %v812, 0.0
        %v836 = vmax.f32 %v815, 0.0
        %v837 = vmax.f32 %v818, 0.0
        %v838 = vmax.f32 %v821, 0.0
        %v839 = vmax.f32 %v824, 0.0
        %v840 = vmax.f32 %v827, 0.0
        %v841 = vmax.f32 %v830, 0.0
        %v842 = vmax.f32 %v833, 0.0
        %843 = vmatpush.msra.mxu0 0.0
        %844 = vmatpush.msra.mxu0 0.0
        %845 = vmatpush.msra.mxu0 0.0
        %846 = vmatpush.msra.mxu0 0.0
        %847 = vmatpush.msra.mxu0 0.0
        %848 = vmatpush.msra.mxu0 0.0
        %849 = vmatpush.msra.mxu0 0.0
        %850 = vmatpush.msra.mxu0 0.0
        %851 = vmatpush.msra.mxu0 %v842
        %852 = vmatpush.msra.mxu0 %v841
        %853 = vmatpush.msra.mxu0 %v840
        %854 = vmatpush.msra.mxu0 %v839
        %855 = vmatpush.msra.mxu0 %v838
        %856 = vmatpush.msra.mxu0 %v837
        %857 = vmatpush.msra.mxu0 %v836
        %858 = vmatpush.msra.mxu0 %v835
        %859 = vmatmul.f32.gmra.mxu0 %v295
        %v860 = vpop.f32.mrf.mxu0
        %v861 = vadd.f32 0.0, %v860
        %862 = vmatmul.f32.gmra.mxu0 %v298
        %v863 = vpop.f32.mrf.mxu0
        %v864 = vadd.f32 0.0, %v863
        %865 = vmatmul.f32.gmra.mxu0 %v301
        %v866 = vpop.f32.mrf.mxu0
        %v867 = vadd.f32 0.0, %v866
        %868 = vmatmul.f32.gmra.mxu0 %v304
        %v869 = vpop.f32.mrf.mxu0
        %v870 = vadd.f32 0.0, %v869
        %871 = vmatmul.f32.gmra.mxu0 %v307
        %v872 = vpop.f32.mrf.mxu0
        %v873 = vadd.f32 0.0, %v872
        %874 = vmatmul.f32.gmra.mxu0 %v310
        %v875 = vpop.f32.mrf.mxu0
        %v876 = vadd.f32 0.0, %v875
        %877 = vmatmul.f32.gmra.mxu0 %v313
        %v878 = vpop.f32.mrf.mxu0
        %v879 = vadd.f32 0.0, %v878
        %880 = vmatmul.f32.gmra.mxu0 %v316
        %v881 = vpop.f32.mrf.mxu0
        %v882 = vadd.f32 0.0, %v881
        %883 = vdwg.mxu0
        %884 = vmatpush.msra.mxu0 0.0
        %885 = vmatpush.msra.mxu0 0.0
        %886 = vmatpush.msra.mxu0 0.0
        %887 = vmatpush.msra.mxu0 0.0
        %888 = vmatpush.msra.mxu0 0.0
        %889 = vmatpush.msra.mxu0 0.0
        %890 = vmatpush.msra.mxu0 0.0
        %891 = vmatpush.msra.mxu0 0.0
        %892 = vmatpush.msra.mxu0 %v882
        %893 = vmatpush.msra.mxu0 %v879
        %894 = vmatpush.msra.mxu0 %v876
        %895 = vmatpush.msra.mxu0 %v873
        %896 = vmatpush.msra.mxu0 %v870
        %897 = vmatpush.msra.mxu0 %v867
        %898 = vmatpush.msra.mxu0 %v864
        %899 = vmatpush.msra.mxu0 %v861
        %900 = vmatmul.f32.gmra.mxu0 %v295
        %v901 = vpop.f32.mrf.mxu0
        %v902 = vadd.f32 0.0, %v901
        %903 = vmatmul.f32.gmra.mxu0 %v298
        %v904 = vpop.f32.mrf.mxu0
        %v905 = vadd.f32 0.0, %v904
        %906 = vmatmul.f32.gmra.mxu0 %v301
        %v907 = vpop.f32.mrf.mxu0
        %v908 = vadd.f32 0.0, %v907
        %909 = vmatmul.f32.gmra.mxu0 %v304
        %v910 = vpop.f32.mrf.mxu0
        %v911 = vadd.f32 0.0, %v910
        %912 = vmatmul.f32.gmra.mxu0 %v307
        %v913 = vpop.f32.mrf.mxu0
        %v914 = vadd.f32 0.0, %v913
        %915 = vmatmul.f32.gmra.mxu0 %v310
        %v916 = vpop.f32.mrf.mxu0
        %v917 = vadd.f32 0.0, %v916
        %918 = vmatmul.f32.gmra.mxu0 %v313
        %v919 = vpop.f32.mrf.mxu0
        %v920 = vadd.f32 0.0, %v919
        %921 = vmatmul.f32.gmra.mxu0 %v316
        %v922 = vpop.f32.mrf.mxu0
        %v923 = vadd.f32 0.0, %v922
        %924 = vdwg.mxu0
        %v925 = vmul.f32 %v902, 2.0
        %v926 = vmul.f32 %v905, 2.0
        %v927 = vmul.f32 %v908, 2.0
        %v928 = vmul.f32 %v911, 2.0
        %v929 = vmul.f32 %v914, 2.0
        %v930 = vmul.f32 %v917, 2.0
        %v931 = vmul.f32 %v920, 2.0
        %v932 = vmul.f32 %v923, 2.0
        %v933 = vsub.f32 %v925, %v835
        %v934 = vsub.f32 %v926, %v836
        %v935 = vsub.f32 %v927, %v837
        %v936 = vsub.f32 %v928, %v838
        %v937 = vsub.f32 %v929, %v839
        %v938 = vsub.f32 %v930, %v840
        %v939 = vsub.f32 %v931, %v841
        %v940 = vsub.f32 %v932, %v842
        %949 = vrot.lane.b32.xlu0 %v861, 64
        %v950 = vpop.permute.xlu0 %949
        %951 = vrot.lane.b32.xlu0 %v864, 64
        %v952 = vpop.permute.xlu0 %951
        %953 = vrot.lane.b32.xlu0 %v867, 64
        %v954 = vpop.permute.xlu0 %953
        %955 = vrot.lane.b32.xlu0 %v870, 64
        %v956 = vpop.permute.xlu0 %955
        %957 = vrot.lane.b32.xlu0 %v873, 64
        %v958 = vpop.permute.xlu0 %957
        %959 = vrot.lane.b32.xlu0 %v876, 64
        %v960 = vpop.permute.xlu0 %959
        %961 = vrot.lane.b32.xlu0 %v879, 64
        %v962 = vpop.permute.xlu0 %961
        %963 = vrot.lane.b32.xlu0 %v882, 64
        %v964 = vpop.permute.xlu0 %963
        %v973 = vsel %vm293, %v835, %v950
        %v974 = vsel %vm293, %v836, %v952
        %v975 = vsel %vm293, %v837, %v954
        %v976 = vsel %vm293, %v838, %v956
        %v977 = vsel %vm293, %v839, %v958
        %v978 = vsel %vm293, %v840, %v960
        %v979 = vsel %vm293, %v841, %v962
        %v980 = vsel %vm293, %v842, %v964
        %v981 = vld [vmem:[%s4] sm:$0xff]
        %v982 = vld [vmem:[%s4 + $0x8] sm:$0xff]
        %v983 = vld [vmem:[%s4 + $0x10] sm:$0xff]
        %v984 = vld [vmem:[%s4 + $0x18] sm:$0xff]
        %v985 = vld [vmem:[%s4 + $0x20] sm:$0xff]
        %v986 = vld [vmem:[%s4 + $0x28] sm:$0xff]
        %v987 = vld [vmem:[%s4 + $0x30] sm:$0xff]
        %v988 = vld [vmem:[%s4 + $0x38] sm:$0xff]
        %v989 = vld [vmem:[%s4 + $0x40] sm:$0xff]
        %v990 = vld [vmem:[%s4 + $0x48] sm:$0xff]
        %v991 = vld [vmem:[%s4 + $0x50] sm:$0xff]
        %v992 = vld [vmem:[%s4 + $0x58] sm:$0xff]
        %v993 = vld [vmem:[%s4 + $0x60] sm:$0xff]
        %v994 = vld [vmem:[%s4 + $0x68] sm:$0xff]
        %v995 = vld [vmem:[%s4 + $0x70] sm:$0xff]
        %v996 = vld [vmem:[%s4 + $0x78] sm:$0xff]
        %v997 = vld [vmem:[%s4 + $0x80] sm:$0xff]
        %v998 = vld [vmem:[%s4 + $0x88] sm:$0xff]
        %v999 = vld [vmem:[%s4 + $0x90] sm:$0xff]
        %v1000 = vld [vmem:[%s4 + $0x98] sm:$0xff]
        %v1001 = vld [vmem:[%s4 + $0xa0] sm:$0xff]
        %v1002 = vld [vmem:[%s4 + $0xa8] sm:$0xff]
        %v1003 = vld [vmem:[%s4 + $0xb0] sm:$0xff]
        %v1004 = vld [vmem:[%s4 + $0xb8] sm:$0xff]
        %1005 = vrot.lane.b32.xlu0 %v500, 48
        %v1006 = vpop.permute.xlu0 %1005
        %v1009 = vsel %vm293, %v933, 0
        %v1012 = vsel %vm293, %v934, 0
        %v1015 = vsel %vm293, %v935, 0
        %v1018 = vsel %vm293, %v936, 0
        %v1021 = vsel %vm293, %v937, 0
        %v1024 = vsel %vm293, %v938, 0
        %v1027 = vsel %vm293, %v939, 0
        %v1030 = vsel %vm293, %v940, 0
        %1032 = vmatpush.msra.mxu0 %v996
        %1033 = vmatpush.msra.mxu0 %v995
        %1034 = vmatpush.msra.mxu0 %v994
        %1035 = vmatpush.msra.mxu0 %v993
        %1036 = vmatpush.msra.mxu0 %v992
        %1037 = vmatpush.msra.mxu0 %v991
        %1038 = vmatpush.msra.mxu0 %v990
        %1039 = vmatpush.msra.mxu0 %v989
        %1040 = vmatpush.msra.mxu0 %v988
        %1041 = vmatpush.msra.mxu0 %v987
        %1042 = vmatpush.msra.mxu0 %v986
        %1043 = vmatpush.msra.mxu0 %v985
        %1044 = vmatpush.msra.mxu0 %v984
        %1045 = vmatpush.msra.mxu0 %v983
        %1046 = vmatpush.msra.mxu0 %v982
        %1047 = vmatpush.msra.mxu0 %v981
        %1048 = vmatmul.f32.gmra.mxu0 %v973
        %v1049 = vpop.f32.mrf.mxu0
        %v1050 = vadd.f32 %v1006, %v1049
        %1051 = vmatmul.f32.gmra.mxu0 %v974
        %v1052 = vpop.f32.mrf.mxu0
        %v1053 = vadd.f32 %v1006, %v1052
        %1054 = vmatmul.f32.gmra.mxu0 %v975
        %v1055 = vpop.f32.mrf.mxu0
        %v1056 = vadd.f32 %v1006, %v1055
        %1057 = vmatmul.f32.gmra.mxu0 %v976
        %v1058 = vpop.f32.mrf.mxu0
        %v1059 = vadd.f32 %v1006, %v1058
        %1060 = vmatmul.f32.gmra.mxu0 %v977
        %v1061 = vpop.f32.mrf.mxu0
        %v1062 = vadd.f32 %v1006, %v1061
        %1063 = vmatmul.f32.gmra.mxu0 %v978
        %v1064 = vpop.f32.mrf.mxu0
        %v1065 = vadd.f32 %v1006, %v1064
        %1066 = vmatmul.f32.gmra.mxu0 %v979
        %v1067 = vpop.f32.mrf.mxu0
        %v1068 = vadd.f32 %v1006, %v1067
        %1069 = vmatmul.f32.gmra.mxu0 %v980
        %v1070 = vpop.f32.mrf.mxu0
        %v1071 = vadd.f32 %v1006, %v1070
        %1072 = vdwg.mxu0
        %1073 = vmatpush.msra.mxu0 0.0
        %1074 = vmatpush.msra.mxu0 0.0
        %1075 = vmatpush.msra.mxu0 0.0
        %1076 = vmatpush.msra.mxu0 0.0
        %1077 = vmatpush.msra.mxu0 0.0
        %1078 = vmatpush.msra.mxu0 0.0
        %1079 = vmatpush.msra.mxu0 0.0
        %1080 = vmatpush.msra.mxu0 0.0
        %1081 = vmatpush.msra.mxu0 %v1004
        %1082 = vmatpush.msra.mxu0 %v1003
        %1083 = vmatpush.msra.mxu0 %v1002
        %1084 = vmatpush.msra.mxu0 %v1001
        %1085 = vmatpush.msra.mxu0 %v1000
        %1086 = vmatpush.msra.mxu0 %v999
        %1087 = vmatpush.msra.mxu0 %v998
        %1088 = vmatpush.msra.mxu0 %v997
        %1089 = vmatmul.f32.gmra.mxu0 %v1009
        %v1090 = vpop.f32.mrf.mxu0
        %v1091 = vadd.f32 %v1050, %v1090
        %1092 = vmatmul.f32.gmra.mxu0 %v1012
        %v1093 = vpop.f32.mrf.mxu0
        %v1094 = vadd.f32 %v1053, %v1093
        %1095 = vmatmul.f32.gmra.mxu0 %v1015
        %v1096 = vpop.f32.mrf.mxu0
        %v1097 = vadd.f32 %v1056, %v1096
        %1098 = vmatmul.f32.gmra.mxu0 %v1018
        %v1099 = vpop.f32.mrf.mxu0
        %v1100 = vadd.f32 %v1059, %v1099
        %1101 = vmatmul.f32.gmra.mxu0 %v1021
        %v1102 = vpop.f32.mrf.mxu0
        %v1103 = vadd.f32 %v1062, %v1102
        %1104 = vmatmul.f32.gmra.mxu0 %v1024
        %v1105 = vpop.f32.mrf.mxu0
        %v1106 = vadd.f32 %v1065, %v1105
        %1107 = vmatmul.f32.gmra.mxu0 %v1027
        %v1108 = vpop.f32.mrf.mxu0
        %v1109 = vadd.f32 %v1068, %v1108
        %1110 = vmatmul.f32.gmra.mxu0 %v1030
        %v1111 = vpop.f32.mrf.mxu0
        %v1112 = vadd.f32 %v1071, %v1111
        %1113 = vdwg.mxu0
        %v1114 = vmax.f32 %v1091, 0.0
        %v1115 = vmax.f32 %v1094, 0.0
        %v1116 = vmax.f32 %v1097, 0.0
        %v1117 = vmax.f32 %v1100, 0.0
        %v1118 = vmax.f32 %v1103, 0.0
        %v1119 = vmax.f32 %v1106, 0.0
        %v1120 = vmax.f32 %v1109, 0.0
        %v1121 = vmax.f32 %v1112, 0.0
        %v1122 = vld [vmem:[%s5] sm:$0x1]
        %1123 = vset.pattern.permute.xlu0 96
        %1124 = vperm.xlu0 %1123, %v292
        %v1125 = vpop.permute.xlu0 %1124
        %v1127 = vperm.slane %v1125, 0
        %v1129 = vsel %vm742, %v1122, 0
        %v1132 = vsel %vm742, %v1114, 0
        %v1135 = vsel %vm742, %v1115, 0
        %v1138 = vsel %vm742, %v1116, 0
        %v1141 = vsel %vm742, %v1117, 0
        %v1144 = vsel %vm742, %v1118, 0
        %v1147 = vsel %vm742, %v1119, 0
        %v1150 = vsel %vm742, %v1120, 0
        %v1153 = vsel %vm742, %v1121, 0
        %1155 = vmatpush.xpose.msra.mxu0 0.0
        %1156 = vmatpush.xpose.msra.mxu0 0.0
        %1157 = vmatpush.xpose.msra.mxu0 0.0
        %1158 = vmatpush.xpose.msra.mxu0 0.0
        %1159 = vmatpush.xpose.msra.mxu0 0.0
        %1160 = vmatpush.xpose.msra.mxu0 0.0
        %1161 = vmatpush.xpose.msra.mxu0 0.0
        %1162 = vmatpush.xpose.msra.mxu0 0.0
        %1163 = vmatpush.xpose.msra.mxu0 %v1153
        %1164 = vmatpush.xpose.msra.mxu0 %v1150
        %1165 = vmatpush.xpose.msra.mxu0 %v1147
        %1166 = vmatpush.xpose.msra.mxu0 %v1144
        %1167 = vmatpush.xpose.msra.mxu0 %v1141
        %1168 = vmatpush.xpose.msra.mxu0 %v1138
        %1169 = vmatpush.xpose.msra.mxu0 %v1135
        %1170 = vmatpush.xpose.msra.mxu0 %v1132
        %1171 = vmatmul.f32.gmra.mxu0 %v1129
        %v1172 = vpop.f32.mrf.mxu0
        %v1173 = vadd.f32 %v1127, %v1172
        %1174 = vdwg.mxu0
        %vm1175 = vcmask 516096
        %1176 = vst.msk [vmem:[%s270] sm:$0x1] %vm1175, %v1173
        %s1177 = sand.u32 %s181, 1
        %s1178 = scalar_lea.sflag [#allocation3], %s1177
        %s1179 = sand.u32 %s181, 1
        %s1180 = scalar_lea.vmem [#allocation2], %s1179
        // Predicated region
        $region49: #{tpu_custom_call.1} parent=47 // pred_check
          %p1181 = pneg %p191
        $region50: #{tpu_custom_call.1} parent=47 // pred_check_branch
          %1183 = sbr.rel (%p1181) target = $region52
        $region51: #{tpu_custom_call.1} parent=47 // pred_region
          %1185 = vsyncadd %s1178, 0
          %s1186 = scalar_lea.hbm %s7, %s21
          %s1188 = sshll.u32 %s1180, 4
          %s1189 = int_to_ptr.vmem [resolvable:$true] %s1188
          %s1190 = sshll.u32 %s1186, 4
          %s1191 = int_to_ptr.hbm [resolvable:$true] %s1190
          %1193 = dma.vmem_to_hbm [thread:$0]  %s1189, 16, %s1191, %s1178
        $region52: #{tpu_custom_call.1} parent=47 // pred_fallthru
          _
      $region48: #{tpu_custom_call.1} parent=5 // pred_fallthru
        _
      %p1194 = scmp.le.s32.totalorder 2, %s16
      // Predicated region
      $region53: #{tpu_custom_call.1} parent=5 // pred_check
        %p1195 = pneg %p1194
      $region54: #{tpu_custom_call.1} parent=5 // pred_check_branch
        %1197 = sbr.rel (%p1195) target = $region56
      $region55: #{tpu_custom_call.1} parent=5 // pred_region
        %s1198 = ssub.s32 %s16, 2
        // Predicated region
        $region57: #{tpu_custom_call.1} parent=55 // pred_check
          %p1199 = pneg %p197
        $region58: #{tpu_custom_call.1} parent=55 // pred_check_branch
          %1201 = sbr.rel (%p1199) target = $region60
        $region59: #{tpu_custom_call.1} parent=55 // pred_region
          %s1202 = sand.u32 %s182, 1
          %s1203 = scalar_lea.sflag [#allocation3], %s1202
          %s1204 = sand.u32 %s182, 1
          %s1205 = scalar_lea.vmem [#allocation2], %s1204
          %1207 = dma.done %s1203, 16
        $region60: #{tpu_custom_call.1} parent=55 // pred_fallthru
          _
      $region56: #{tpu_custom_call.1} parent=5 // pred_fallthru
        _
    $region6: #{tpu_custom_call.1} parent=1 // loop_footer
      %s20 = sadd.s32 1, %s16
    $region7: #{tpu_custom_call.1} parent=1 // loop_footer_branch
      %15 = sbr.rel target = $region3
    $region8: #{tpu_custom_call.1} parent=1 // loop_exit
      _
    %1208 = vsyncpa [#allocation3], 1
    %s1209 = scalar_lea.sflag [#allocation3], 1
    %1210 = vsyncpa %s1209, 1

</llo_original>
